<compile_context>
chip_gen: v7x
topology: tpu7x:2x2x1
jax: 0.10.0
libtpu: 0.0.40
codegen_flags: <defaults>
</compile_context>

<pallas_src>
import jax
import jax.numpy as jnp
from jax.experimental import pallas as pl
from jax.experimental.pallas import tpu as pltpu


def spatial_attention_kernel(t_ref, b_ref, x_ref, o_ref):
    # t_ref: VMEM (2*H*W, H*W) bf16 -- fused conv matrix (avg rows, then max rows)
    # b_ref: SMEM (1,) f32          -- conv bias
    # x_ref: VMEM (C, H*W)          -- one (batch, depth) slice, lane-dense
    # o_ref: VMEM (1, H*W)          -- sigmoid(conv) for that slice, lane-dense
    C = x_ref.shape[0]

    # Running channel sum / max, read channel-by-channel from the Ref so no
    # full-block f32 copy of x is ever materialized (chunked C reduction).
    x0 = x_ref[pl.ds(0, 1), :].astype(jnp.float32)            # (1, H*W)

    def body(c, carry):
        s, m = carry
        xc = x_ref[pl.ds(c, 1), :].astype(jnp.float32)
        return s + xc, jnp.maximum(m, xc)

    s, m = jax.lax.fori_loop(1, C, body, (x0, x0), unroll=True)
    avg = s * (1.0 / C)

    # One fused bf16 MXU matmul: [avg | max] (1, 2*H*W) @ T (2*H*W, H*W),
    # accumulated in f32. Output stays lane-dense all the way to the store.
    pm = jnp.concatenate([avg, m], axis=-1).astype(t_ref.dtype)
    conv = jnp.dot(pm, t_ref[...], preferred_element_type=jnp.float32)
    o_ref[...] = jax.nn.sigmoid(conv + b_ref[0]).astype(o_ref.dtype)


def _build_conv_matrix(weight, H, W, dtype=jnp.bfloat16):
    """Dense (2*H*W, H*W) matrix T with
         T[c*H*W + hi*W + wi, ho*W + wo] = weight[0, c, 0, hi-ho+3, wi-wo+3]
       when both kernel offsets are in [0, 6], else 0, so that
         [avg_flat | max_flat] @ T
       equals the zero-padded 7x7 cross-correlation (PyTorch Conv3d, k_d=1)."""
    wgt = weight.reshape(2, 7, 7).astype(jnp.float32)          # (c, ki, kj)
    hi = jnp.arange(H)
    wi = jnp.arange(W)
    ki = hi[:, None] - hi[None, :] + 3                         # (H_in, H_out)
    kj = wi[:, None] - wi[None, :] + 3                         # (W_in, W_out)
    valid_i = (ki >= 0) & (ki <= 6)
    valid_j = (kj >= 0) & (kj <= 6)
    t = wgt[:, jnp.clip(ki, 0, 6)][:, :, :, jnp.clip(kj, 0, 6)]
    # t: (c, H_in, H_out, W_in, W_out)
    t = jnp.where((valid_i[:, :, None, None] & valid_j[None, None, :, :])[None],
                  t, 0.0)
    # -> (c, H_in, W_in, H_out, W_out) -> (2*H*W, H*W)
    t = jnp.transpose(t, (0, 1, 3, 2, 4)).reshape(2 * H * W, H * W)
    return t.astype(dtype)


def spatial_attention(x, weight, bias):
    """x: (N, C, D, H, W); weight: (1, 2, 1, 7, 7); bias: (1,) -> (N, 1, D, H, W)"""
    N, C, D, H, W = x.shape
    HW = H * W
    tmat = _build_conv_matrix(weight, H, W)                    # (2*HW, HW) bf16
    b = bias.reshape(1).astype(jnp.float32)
    # Free, row-major-compatible reshape: trailing dim becomes lane-dense and
    # depth slices are addressable as 128-aligned blocks of the last dim.
    x2 = x.reshape(N, C, D * HW)

    out = pl.pallas_call(
        spatial_attention_kernel,
        out_shape=jax.ShapeDtypeStruct((N, D, 1, HW), x.dtype),
        grid=(N, D),
        in_specs=[
            # Fused conv matrix: constant block index, stays resident.
            pl.BlockSpec((2 * HW, HW), lambda n, d: (0, 0)),
            # Bias scalar in SMEM.
            pl.BlockSpec(memory_space=pltpu.MemorySpace.SMEM),
            # One (batch, depth) slice: (C, H*W), ~C*H*W*4 bytes per step.
            pl.BlockSpec((None, C, HW), lambda n, d: (n, 0, d)),
        ],
        out_specs=pl.BlockSpec((None, None, 1, HW), lambda n, d: (n, d, 0, 0)),
        compiler_params=pltpu.CompilerParams(
            dimension_semantics=("parallel", "parallel"),
            vmem_limit_bytes=32 * 1024 * 1024),
    )(tmat, b, x2)

    # Row-major-compatible reshape back to the PyTorch output layout.
    return out.reshape(N, D, H, W)[:, None]


def reference(x, weight, bias):
    """Pure-JAX reference mirroring the PyTorch forward (f32 throughout)."""
    avg = jnp.mean(x, axis=1, keepdims=True)
    mx = jnp.max(x, axis=1, keepdims=True)
    out = jnp.concatenate([avg, mx], axis=1)
    conv = jax.lax.conv_general_dilated(
        out, weight,
        window_strides=(1, 1, 1),
        padding=((0, 0), (3, 3), (3, 3)),
        dimension_numbers=("NCDHW", "OIDHW", "NCDHW"))
    return jax.nn.sigmoid(conv + bias.reshape(1, 1, 1, 1, 1))


if __name__ == "__main__":
    key = jax.random.PRNGKey(0)
    kx, kw, kb = jax.random.split(key, 3)

    # Small shapes consistent with Conv3d input: (N, C, D, H, W)
    N, C, D, H, W = 2, 4, 3, 16, 16
    x = jax.random.normal(kx, (N, C, D, H, W), dtype=jnp.float32)

    # Deterministic synthetic Conv3d(2, 1, (1, 7, 7)) parameters.
    fan_in = 2 * 1 * 7 * 7
    bound = 1.0 / (fan_in ** 0.5)
    weight = jax.random.uniform(kw, (1, 2, 1, 7, 7), jnp.float32, -bound, bound)
    bias = jax.random.uniform(kb, (1,), jnp.float32, -bound, bound)

    out = spatial_attention(x, weight, bias)
    out = jax.block_until_ready(out)

    ref = reference(x, weight, bias)
    assert out.shape == (N, 1, D, H, W)
    # bf16 MXU operands (f32 accumulation) -> ~1e-3-level deviation from the
    # pure-f32 reference; assert with headroom.
    err = float(jnp.max(jnp.abs(out - ref)))
    assert err < 1e-2, f"max err {err}"

    print("KERNEL_OK")
</pallas_src>

<mosaic_0001>
module attributes {stable_mosaic.version = 11 : i64} {
  func.func @spatial_attention_kernel(%arg0: i32, %arg1: i32, %arg2: memref<512x256xbf16, #tpu.memory_space<vmem>>, %arg3: memref<1xf32, #tpu.memory_space<smem>>, %arg4: memref<1x4x256xf32, #tpu.memory_space<vmem>>, %arg5: memref<1x1x1x256xf32, #tpu.memory_space<vmem>>) attributes {dimension_semantics = [#tpu.dimension_semantics<parallel>, #tpu.dimension_semantics<parallel>], iteration_bounds = array<i64: 2, 3>, scalar_prefetch = 0 : i64, scratch_operands = 0 : i64, tpu.core_type = #tpu.core_type<tc>, window_params = [{pipeline_mode = #tpu.pipeline_mode<synchronous>, transform_indices = @transform_0, window_bounds = array<i64: 512, 256>}, {transform_indices = @transform_1, window_bounds = array<i64: 1>}, {transform_indices = @transform_2, window_bounds = array<i64: 1, 4, 256>}, {transform_indices = @transform_3, window_bounds = array<i64: 1, 1, 1, 256>}]} {
    %c0 = arith.constant 0 : index
    %c0_0 = arith.constant 0 : index
    %c0_1 = arith.constant 0 : index
    %0 = vector.load %arg4[%c0, %c0_0, %c0_1] : memref<1x4x256xf32, #tpu.memory_space<vmem>>, vector<1x1x256xf32>
    %1 = vector.shape_cast %0 : vector<1x1x256xf32> to vector<1x256xf32>
    %c1_i32 = arith.constant 1 : i32
    %c0_2 = arith.constant 0 : index
    %2 = arith.index_cast %c1_i32 : i32 to index
    %c0_3 = arith.constant 0 : index
    %3 = vector.load %arg4[%c0_2, %2, %c0_3] : memref<1x4x256xf32, #tpu.memory_space<vmem>>, vector<1x1x256xf32>
    %4 = vector.shape_cast %3 : vector<1x1x256xf32> to vector<1x256xf32>
    %5 = arith.addf %1, %4 : vector<1x256xf32>
    %6 = arith.maximumf %1, %4 : vector<1x256xf32>
    %c2_i32 = arith.constant 2 : i32
    %c0_4 = arith.constant 0 : index
    %7 = arith.index_cast %c2_i32 : i32 to index
    %c0_5 = arith.constant 0 : index
    %8 = vector.load %arg4[%c0_4, %7, %c0_5] : memref<1x4x256xf32, #tpu.memory_space<vmem>>, vector<1x1x256xf32>
    %9 = vector.shape_cast %8 : vector<1x1x256xf32> to vector<1x256xf32>
    %10 = arith.addf %5, %9 : vector<1x256xf32>
    %11 = arith.maximumf %6, %9 : vector<1x256xf32>
    %c3_i32 = arith.constant 3 : i32
    %c0_6 = arith.constant 0 : index
    %12 = arith.index_cast %c3_i32 : i32 to index
    %c0_7 = arith.constant 0 : index
    %13 = vector.load %arg4[%c0_6, %12, %c0_7] : memref<1x4x256xf32, #tpu.memory_space<vmem>>, vector<1x1x256xf32>
    %14 = vector.shape_cast %13 : vector<1x1x256xf32> to vector<1x256xf32>
    %15 = arith.addf %10, %14 : vector<1x256xf32>
    %16 = arith.maximumf %11, %14 : vector<1x256xf32>
    %c3_i32_8 = arith.constant 3 : i32
    %cst = arith.constant 2.500000e-01 : f32
    %17 = vector.broadcast %cst : f32 to vector<1x256xf32>
    %18 = arith.mulf %15, %17 : vector<1x256xf32>
    %19 = tpu.concatenate %18, %16 in 1 : vector<1x256xf32>, vector<1x256xf32> -> vector<1x512xf32>
    %20 = arith.truncf %19 : vector<1x512xf32> to vector<1x512xbf16>
    %c0_9 = arith.constant 0 : index
    %c0_10 = arith.constant 0 : index
    %21 = vector.load %arg2[%c0_9, %c0_10] : memref<512x256xbf16, #tpu.memory_space<vmem>>, vector<512x256xbf16>
    %cst_11 = arith.constant dense<0.000000e+00> : vector<1x256xf32>
    %22 = tpu.matmul %20, %21, %cst_11 {dimension_numbers = #tpu.dot_dimension_numbers<[1], [0], [0], [1], [0, 0, 1, 1], [], []>} : vector<1x512xbf16>, vector<512x256xbf16>, vector<1x256xf32> -> vector<1x256xf32>
    %c0_12 = arith.constant 0 : index
    %23 = memref.load %arg3[%c0_12] : memref<1xf32, #tpu.memory_space<smem>>
    %24 = vector.broadcast %23 : f32 to vector<1x256xf32>
    %25 = arith.addf %22, %24 : vector<1x256xf32>
    %26 = arith.negf %25 : vector<1x256xf32>
    %27 = math.exp %26 : vector<1x256xf32>
    %cst_13 = arith.constant 1.000000e+00 : f32
    %28 = vector.broadcast %cst_13 : f32 to vector<1x256xf32>
    %29 = arith.addf %28, %27 : vector<1x256xf32>
    %30 = arith.divf %28, %29 : vector<1x256xf32>
    %c0_14 = arith.constant 0 : index
    %c0_15 = arith.constant 0 : index
    %c0_16 = arith.constant 0 : index
    %c0_17 = arith.constant 0 : index
    %31 = vector.load %arg5[%c0_14, %c0_15, %c0_16, %c0_17] : memref<1x1x1x256xf32, #tpu.memory_space<vmem>>, vector<1x1x1x256xf32>
    %32 = vector.shape_cast %31 : vector<1x1x1x256xf32> to vector<1x256xf32>
    %33 = vector.shape_cast %30 : vector<1x256xf32> to vector<1x1x1x256xf32>
    tpu.vector_store %arg5[%c0_14, %c0_15, %c0_16, %c0_17], %33 {strides = array<i32>} : memref<1x1x1x256xf32, #tpu.memory_space<vmem>>, vector<1x1x1x256xf32>,
    return
  }
  func.func @transform_0(%arg0: i32, %arg1: i32) -> (i32, i32) {
    %c0_i32 = arith.constant 0 : i32
    %c0_i32_0 = arith.constant 0 : i32
    %c0_i32_1 = arith.constant 0 : i32
    return %c0_i32, %c0_i32_0 : i32, i32
  }
  func.func @transform_1(%arg0: i32, %arg1: i32) -> i32 {
    %c0_i32 = arith.constant 0 : i32
    %c0_i32_0 = arith.constant 0 : i32
    return %c0_i32 : i32
  }
  func.func @transform_2(%arg0: i32, %arg1: i32) -> (i32, i32, i32) {
    %c0_i32 = arith.constant 0 : i32
    %c0_i32_0 = arith.constant 0 : i32
    return %arg0, %c0_i32, %arg1 : i32, i32, i32
  }
  func.func @transform_3(%arg0: i32, %arg1: i32) -> (i32, i32, i32, i32) {
    %c0_i32 = arith.constant 0 : i32
    %c0_i32_0 = arith.constant 0 : i32
    %c0_i32_1 = arith.constant 0 : i32
    return %arg0, %arg1, %c0_i32, %c0_i32_0 : i32, i32, i32, i32
  }
}

</mosaic_0001>

<llo_original>
// kernel: tpu_custom_call.1
$region0: #{tpu_custom_call.1}
  #allocation0 [shape = 'u32[]', space=smem, size = 0x4, offset = 0x4, fixed_abs, tag = 'smem constant byte address 0x4 - core index']
  #allocation1 [shape = 'u32[144,128]{1,0:T(1,128)}', space=vmem, size = 0x12000, scoped, tag = 'internal scratch']
  #allocation2 [shape = 'f32[1]{0:T(128)S(6)}', space=smem, size = 0x200, scoped, tag = 'scoped memory for tpu_custom_call.1']
  %s0 = inlined_call_operand.hbm [shape: bf16[512,256], index: 0, kind: input, shape index: {}]
  %s1 = inlined_call_operand.<no memory space> [shape: f32[1], index: 1, kind: input, shape index: {}]
  %s2 = inlined_call_operand.hbm [shape: f32[2,4,768], index: 2, kind: input, shape index: {}]
  %s3 = inlined_call_operand.hbm [shape: f32[2,3,1,256], index: 3, kind: output, shape index: {}]
  %s4 = sld [smem:[#allocation0]]
  $region53: #{tpu_custom_call.1} parent=0
    _
  %s6 = ssub.s32 1, %s4
  %s7 = scalar_select 0, %s6, %s4
  %8 = sst [smem:[#allocation2]] %s1
  $region1: #{tpu_custom_call.1} parent=0
    #allocation3 [shape = 'u8[262144]{0}', space=vmem, size = 0x40000, scoped, tag = 'input window, operand 0, single buffered']
    #allocation4 [shape = 's32[2]{0}', space=sflag, size = 0x8, scoped, tag = 'scoped memory for tpu_custom_call.1']
    #allocation5 [shape = 's32[2]{0}', space=sflag, size = 0x8, scoped, tag = 'scoped memory for tpu_custom_call.1']
    #allocation6 [shape = 'u8[8192]{0}', space=vmem, size = 0x2000, scoped, tag = 'input window, operand 2']
    #allocation7 [shape = 's32[2]{0}', space=sflag, size = 0x8, scoped, tag = 'scoped memory for tpu_custom_call.1']
    #allocation8 [shape = 'u8[2048]{0}', space=vmem, size = 0x800, scoped, tag = 'output window, operand 0']
    %9 = vsyncpa [#allocation4], 0
    %10 = vsyncpa [#allocation7], 0
    %s11 = scalar_lea.sflag [#allocation7], 1
    %12 = vsyncpa %s11, 0
    %13 = vsyncpa [#allocation5], 0
    %s14 = scalar_lea.sflag [#allocation5], 1
    %15 = vsyncpa %s14, 0
    loop: start=0, step=1, limit=8
    $region2: #{tpu_custom_call.1} parent=1 // loop_pre_header
      _
    $region3: #{tpu_custom_call.1} parent=1 // loop_header
      %s17 = sphi 0, %s21
      %p18 = scmp.ge.s32.totalorder %s17, 8
      %s24 = sphi 0, %s36
      %s25 = sphi 0, %s32
      %s26 = sphi 0, %s24
      %s27 = sphi 0, %s25
      %s28 = sphi 0, %s26
      %s29 = sphi 0, %s27
      %s37 = sphi 0, %s37
      %s39 = sphi 0, %s37
      %s40 = sphi 0, %s39
      %s54 = sphi 0, %s40
      %s58 = sphi 0, %s58
      %s60 = sphi 0, %s58
      %s61 = sphi 0, %s60
      %s75 = sphi 0, %s61
      %s83 = sphi 0, %s85
      %s86 = sphi 0, %s83
      %s87 = sphi 0, %s86
      %s103 = sphi 0, %s87
      %s111 = sphi 0, %s113
      %s114 = sphi 0, %s111
      %s115 = sphi 0, %s114
      %s131 = sphi 0, %s115
    $region4: #{tpu_custom_call.1} parent=1 // loop_header_branch
      %20 = sbr.rel (%p18) target = $region8
    $region5: #{tpu_custom_call.1} parent=1 // loop_body
      %s22 = ssub.s32 %s17, 1
      %s23 = ssub.s32 %s17, 2
      %s30 = sadd.s32 1, %s25
      %p31 = scmp.ge.s32.totalorder %s30, 3
      %s32 = scalar_select %p31, 0, %s30
      %s33 = sadd.s32 1, %s24
      %s34 = scalar_select %p31, %s33, %s24
      %p35 = scmp.ge.s32.totalorder %s34, 2
      %s36 = scalar_select %p35, 0, %s34
      %s38 = sadd.s32 %s37, 1
      %p41 = scmp.eq.s32.totalorder %s17, 5
      %p42 = scmp.ne.s32.totalorder %s37, %s39
      %p43 = scmp.eq.s32.totalorder %s17, 0
      %p44 = por %p42, %p43
      %p45 = scmp.ne.s32.totalorder %s37, %s39
      %p46 = scmp.eq.s32.totalorder %s22, 5
      %p47 = por %p45, %p46
      %p48 = scmp.ne.s32.totalorder %s39, %s40
      %p49 = scmp.eq.s32.totalorder %s22, 0
      %p50 = por %p48, %p49
      %p51 = scmp.ne.s32.totalorder %s39, %s40
      %p52 = scmp.eq.s32.totalorder %s23, 5
      %p53 = por %p51, %p52
      %p55 = scmp.ne.s32.totalorder %s40, %s54
      %p56 = scmp.eq.s32.totalorder %s23, 0
      %p57 = por %p55, %p56
      %s59 = sadd.s32 %s58, 1
      %p62 = scmp.eq.s32.totalorder %s17, 5
      %p63 = scmp.ne.s32.totalorder %s58, %s60
      %p64 = scmp.eq.s32.totalorder %s17, 0
      %p65 = por %p63, %p64
      %p66 = scmp.ne.s32.totalorder %s58, %s60
      %p67 = scmp.eq.s32.totalorder %s22, 5
      %p68 = por %p66, %p67
      %p69 = scmp.ne.s32.totalorder %s60, %s61
      %p70 = scmp.eq.s32.totalorder %s22, 0
      %p71 = por %p69, %p70
      %p72 = scmp.ne.s32.totalorder %s60, %s61
      %p73 = scmp.eq.s32.totalorder %s23, 5
      %p74 = por %p72, %p73
      %p76 = scmp.ne.s32.totalorder %s61, %s75
      %p77 = scmp.eq.s32.totalorder %s23, 0
      %p78 = por %p76, %p77
      %s79 = ssub.s32 %s24, %s36
      %s80 = ssub.s32 %s25, %s32
      %s81 = sor.u32 %s79, %s80
      %p82 = scmp.eq.s32.totalorder %s81, 0
      %s84 = sadd.s32 %s83, 1
      %s85 = scalar_select %p82, %s83, %s84
      %p88 = pneg %p82
      %p89 = scmp.eq.s32.totalorder %s17, 5
      %p90 = por %p88, %p89
      %p91 = scmp.ne.s32.totalorder %s83, %s86
      %p92 = scmp.eq.s32.totalorder %s17, 0
      %p93 = por %p91, %p92
      %p94 = scmp.ne.s32.totalorder %s83, %s86
      %p95 = scmp.eq.s32.totalorder %s22, 5
      %p96 = por %p94, %p95
      %p97 = scmp.ne.s32.totalorder %s86, %s87
      %p98 = scmp.eq.s32.totalorder %s22, 0
      %p99 = por %p97, %p98
      %p100 = scmp.ne.s32.totalorder %s86, %s87
      %p101 = scmp.eq.s32.totalorder %s23, 5
      %p102 = por %p100, %p101
      %p104 = scmp.ne.s32.totalorder %s87, %s103
      %p105 = scmp.eq.s32.totalorder %s23, 0
      %p106 = por %p104, %p105
      %s107 = ssub.s32 %s24, %s36
      %s108 = ssub.s32 %s25, %s32
      %s109 = sor.u32 %s107, %s108
      %p110 = scmp.eq.s32.totalorder %s109, 0
      %s112 = sadd.s32 %s111, 1
      %s113 = scalar_select %p110, %s111, %s112
      %p116 = pneg %p110
      %p117 = scmp.eq.s32.totalorder %s17, 5
      %p118 = por %p116, %p117
      %p119 = scmp.ne.s32.totalorder %s111, %s114
      %p120 = scmp.eq.s32.totalorder %s17, 0
      %p121 = por %p119, %p120
      %p122 = scmp.ne.s32.totalorder %s111, %s114
      %p123 = scmp.eq.s32.totalorder %s22, 5
      %p124 = por %p122, %p123
      %p125 = scmp.ne.s32.totalorder %s114, %s115
      %p126 = scmp.eq.s32.totalorder %s22, 0
      %p127 = por %p125, %p126
      %p128 = scmp.ne.s32.totalorder %s114, %s115
      %p129 = scmp.eq.s32.totalorder %s23, 5
      %p130 = por %p128, %p129
      %p132 = scmp.ne.s32.totalorder %s115, %s131
      %p133 = scmp.eq.s32.totalorder %s23, 0
      %p134 = por %p132, %p133
      %p135 = scmp.le.s32.totalorder 1, %s17
      %p136 = scmp.lt.s32.totalorder %s17, 7
      %p137 = pnand %p135, %p136
      %p138 = pneg %p137
      // Predicated region
      $region9: #{tpu_custom_call.1} parent=5 // pred_check
        _
      $region10: #{tpu_custom_call.1} parent=5 // pred_check_branch
        %140 = sbr.rel (%p137) target = $region12
      $region11: #{tpu_custom_call.1} parent=5 // pred_region
        %s141 = ssub.s32 %s17, 1
        // Predicated region
        $region13: #{tpu_custom_call.1} parent=11 // pred_check
          %p142 = pneg %p50
        $region14: #{tpu_custom_call.1} parent=11 // pred_check_branch
          %144 = sbr.rel (%p142) target = $region16
        $region15: #{tpu_custom_call.1} parent=11 // pred_region
          %s146 = ssub.s32 8192, 8192
          %147 = vsyncadd [#allocation4], %s146
          %s148 = sshll.u32 [#allocation3], 4
          %s149 = int_to_ptr.vmem [resolvable:$true] %s148
          %154 = dma.hbm_to_vmem [thread:$0]  %s0, 8192, %s149, [#allocation4], 128, 128, 8
        $region16: #{tpu_custom_call.1} parent=11 // pred_fallthru
          _
        // Predicated region
        $region17: #{tpu_custom_call.1} parent=11 // pred_check
          %p155 = pneg %p71
        $region18: #{tpu_custom_call.1} parent=11 // pred_check_branch
          %157 = sbr.rel (%p155) target = $region20
        $region19: #{tpu_custom_call.1} parent=11 // pred_region
          _
        $region20: #{tpu_custom_call.1} parent=11 // pred_fallthru
          _
      $region12: #{tpu_custom_call.1} parent=5 // pred_fallthru
        _
      %p158 = scmp.lt.s32.totalorder %s17, 6
      // Predicated region
      $region21: #{tpu_custom_call.1} parent=5 // pred_check
        %p159 = pneg %p158
      $region22: #{tpu_custom_call.1} parent=5 // pred_check_branch
        %161 = sbr.rel (%p159) target = $region24
      $region23: #{tpu_custom_call.1} parent=5 // pred_region
        // Predicated region
        $region25: #{tpu_custom_call.1} parent=23 // pred_check
          %p162 = pneg %p93
        $region26: #{tpu_custom_call.1} parent=23 // pred_check_branch
          %164 = sbr.rel (%p162) target = $region28
        $region27: #{tpu_custom_call.1} parent=23 // pred_region
          %s165 = sand.u32 %s83, 1
          %s166 = scalar_lea.sflag [#allocation7], %s165
          %s167 = sand.u32 %s83, 1
          %s168 = smul.addr %s167, 8
          %s169 = scalar_lea.vmem [#allocation6], %s168
          %s170 = smul.u32 2, %s25
          %s172 = ssub.s32 128, 128
          %173 = vsyncadd %s166, %s172
          %s174 = smul.addr %s24, 6
          %s175 = sadd.s32 %s170, %s174
          %s176 = smul.addr %s175, 64
          %s177 = scalar_lea.hbm %s2, %s176
          %s179 = sshll.u32 %s169, 4
          %s180 = int_to_ptr.vmem [resolvable:$true] %s179
          %182 = dma.hbm_to_vmem [thread:$0]  %s177, 128, %s180, %s166
        $region28: #{tpu_custom_call.1} parent=23 // pred_fallthru
          _
      $region24: #{tpu_custom_call.1} parent=5 // pred_fallthru
        _
      %p183 = scmp.le.s32.totalorder 1, %s17
      %p184 = scmp.lt.s32.totalorder %s17, 7
      %p185 = pnand %p183, %p184
      %p186 = pneg %p185
      // Predicated region
      $region29: #{tpu_custom_call.1} parent=5 // pred_check
        _
      $region30: #{tpu_custom_call.1} parent=5 // pred_check_branch
        %188 = sbr.rel (%p185) target = $region32
      $region31: #{tpu_custom_call.1} parent=5 // pred_region
        %s189 = ssub.s32 %s17, 1
        // Predicated region
        $region33: #{tpu_custom_call.1} parent=31 // pred_check
          %p190 = pneg %p50
        $region34: #{tpu_custom_call.1} parent=31 // pred_check_branch
          %192 = sbr.rel (%p190) target = $region36
        $region35: #{tpu_custom_call.1} parent=31 // pred_region
          %193 = dma.done [#allocation4], 8192
        $region36: #{tpu_custom_call.1} parent=31 // pred_fallthru
          _
        %s194 = sand.u32 %s86, 1
        %s195 = scalar_lea.sflag [#allocation7], %s194
        %s196 = sand.u32 %s86, 1
        %s197 = smul.addr %s196, 8
        %s198 = scalar_lea.vmem [#allocation6], %s197
        // Predicated region
        $region37: #{tpu_custom_call.1} parent=31 // pred_check
          %p199 = pneg %p99
        $region38: #{tpu_custom_call.1} parent=31 // pred_check_branch
          %201 = sbr.rel (%p199) target = $region40
        $region39: #{tpu_custom_call.1} parent=31 // pred_region
          %202 = dma.done %s195, 128
        $region40: #{tpu_custom_call.1} parent=31 // pred_fallthru
          _
        %p203 = pneg %p50
        %p204 = pneg %p47
        %p205 = pneg %p71
        %p206 = pneg %p68
        %s207 = sand.u32 %s86, 1
        %s208 = scalar_lea.sflag [#allocation7], %s207
        %s209 = sand.u32 %s86, 1
        %s210 = smul.addr %s209, 8
        %s211 = scalar_lea.vmem [#allocation6], %s210
        %p212 = pneg %p99
        %p213 = pneg %p96
        %p214 = pneg %p127
        %p215 = pneg %p124
        %s216 = sand.u32 %s114, 1
        %s217 = scalar_lea.sflag [#allocation5], %s216
        %s218 = sand.u32 %s114, 1
        %s219 = smul.addr %s218, 2
        %s220 = scalar_lea.vmem [#allocation8], %s219
        %s221 = smul.u32 2, %s27
        %v222 = vld [vmem:[%s198] ss:$4 sm:$0x3]
        %s223 = scalar_lea.vmem %s198, 1 [#allocation6]
        %v224 = vld [vmem:[%s223] ss:$4 sm:$0x3]
        %v225 = vadd.f32 %v222, %v224
        %v226 = vmax.f32 %v222, %v224
        %s227 = scalar_lea.vmem %s198, 2 [#allocation6]
        %v228 = vld [vmem:[%s227] ss:$4 sm:$0x3]
        %v229 = vadd.f32 %v225, %v228
        %v230 = vmax.f32 %v226, %v228
        %s231 = scalar_lea.vmem %s198, 3 [#allocation6]
        %v232 = vld [vmem:[%s231] ss:$4 sm:$0x3]
        %v233 = vadd.f32 %v229, %v232
        %v234 = vmax.f32 %v230, %v232
        %v235 = vmul.f32 %v233, 0.25
        %v237 = vlaneseq
        %v238 = vshrl.u32 %v237, 7
        %v239 = vsub.s32 0, %v238
        %v240 = vrot.slane %v235, %v239
        %v241 = vlaneseq
        %v242 = vshrl.u32 %v241, 7
        %v243 = vsub.s32 1, %v242
        %v244 = vrot.slane %v235, %v243
        %v248 = vlaneseq
        %v249 = vshrl.u32 %v248, 7
        %v250 = vsub.s32 0, %v249
        %v251 = vrot.slane %v234, %v250
        %v252 = vlaneseq
        %v253 = vshrl.u32 %v252, 7
        %v254 = vsub.s32 1, %v253
        %v255 = vrot.slane %v234, %v254
        %v258 = vpack.c.bf16 %v240, %v240
        %v259 = vpack.c.bf16 %v244, %v244
        %v260 = vpack.c.bf16 %v251, %v251
        %v261 = vpack.c.bf16 %v255, %v255
        %v262 = vld [vmem:[#allocation3] sm:$0xff]
        %v263 = vld [vmem:[#allocation3 + $0x8] sm:$0xff]
        %v264 = vld [vmem:[#allocation3 + $0x10] sm:$0xff]
        %v265 = vld [vmem:[#allocation3 + $0x18] sm:$0xff]
        %v266 = vld [vmem:[#allocation3 + $0x20] sm:$0xff]
        %v267 = vld [vmem:[#allocation3 + $0x28] sm:$0xff]
        %v268 = vld [vmem:[#allocation3 + $0x30] sm:$0xff]
        %v269 = vld [vmem:[#allocation3 + $0x38] sm:$0xff]
        %v270 = vld [vmem:[#allocation3 + $0x40] sm:$0xff]
        %v271 = vld [vmem:[#allocation3 + $0x48] sm:$0xff]
        %v272 = vld [vmem:[#allocation3 + $0x50] sm:$0xff]
        %v273 = vld [vmem:[#allocation3 + $0x58] sm:$0xff]
        %v274 = vld [vmem:[#allocation3 + $0x60] sm:$0xff]
        %v275 = vld [vmem:[#allocation3 + $0x68] sm:$0xff]
        %v276 = vld [vmem:[#allocation3 + $0x70] sm:$0xff]
        %v277 = vld [vmem:[#allocation3 + $0x78] sm:$0xff]
        %v278 = vld [vmem:[#allocation3 + $0x80] sm:$0xff]
        %v279 = vld [vmem:[#allocation3 + $0x88] sm:$0xff]
        %v280 = vld [vmem:[#allocation3 + $0x90] sm:$0xff]
        %v281 = vld [vmem:[#allocation3 + $0x98] sm:$0xff]
        %v282 = vld [vmem:[#allocation3 + $0xa0] sm:$0xff]
        %v283 = vld [vmem:[#allocation3 + $0xa8] sm:$0xff]
        %v284 = vld [vmem:[#allocation3 + $0xb0] sm:$0xff]
        %v285 = vld [vmem:[#allocation3 + $0xb8] sm:$0xff]
        %v286 = vld [vmem:[#allocation3 + $0xc0] sm:$0xff]
        %v287 = vld [vmem:[#allocation3 + $0xc8] sm:$0xff]
        %v288 = vld [vmem:[#allocation3 + $0xd0] sm:$0xff]
        %v289 = vld [vmem:[#allocation3 + $0xd8] sm:$0xff]
        %v290 = vld [vmem:[#allocation3 + $0xe0] sm:$0xff]
        %v291 = vld [vmem:[#allocation3 + $0xe8] sm:$0xff]
        %v292 = vld [vmem:[#allocation3 + $0xf0] sm:$0xff]
        %v293 = vld [vmem:[#allocation3 + $0xf8] sm:$0xff]
        %v294 = vld [vmem:[#allocation3 + $0x100] sm:$0xff]
        %v295 = vld [vmem:[#allocation3 + $0x108] sm:$0xff]
        %v296 = vld [vmem:[#allocation3 + $0x110] sm:$0xff]
        %v297 = vld [vmem:[#allocation3 + $0x118] sm:$0xff]
        %v298 = vld [vmem:[#allocation3 + $0x120] sm:$0xff]
        %v299 = vld [vmem:[#allocation3 + $0x128] sm:$0xff]
        %v300 = vld [vmem:[#allocation3 + $0x130] sm:$0xff]
        %v301 = vld [vmem:[#allocation3 + $0x138] sm:$0xff]
        %v302 = vld [vmem:[#allocation3 + $0x140] sm:$0xff]
        %v303 = vld [vmem:[#allocation3 + $0x148] sm:$0xff]
        %v304 = vld [vmem:[#allocation3 + $0x150] sm:$0xff]
        %v305 = vld [vmem:[#allocation3 + $0x158] sm:$0xff]
        %v306 = vld [vmem:[#allocation3 + $0x160] sm:$0xff]
        %v307 = vld [vmem:[#allocation3 + $0x168] sm:$0xff]
        %v308 = vld [vmem:[#allocation3 + $0x170] sm:$0xff]
        %v309 = vld [vmem:[#allocation3 + $0x178] sm:$0xff]
        %v310 = vld [vmem:[#allocation3 + $0x180] sm:$0xff]
        %v311 = vld [vmem:[#allocation3 + $0x188] sm:$0xff]
        %v312 = vld [vmem:[#allocation3 + $0x190] sm:$0xff]
        %v313 = vld [vmem:[#allocation3 + $0x198] sm:$0xff]
        %v314 = vld [vmem:[#allocation3 + $0x1a0] sm:$0xff]
        %v315 = vld [vmem:[#allocation3 + $0x1a8] sm:$0xff]
        %v316 = vld [vmem:[#allocation3 + $0x1b0] sm:$0xff]
        %v317 = vld [vmem:[#allocation3 + $0x1b8] sm:$0xff]
        %v318 = vld [vmem:[#allocation3 + $0x1c0] sm:$0xff]
        %v319 = vld [vmem:[#allocation3 + $0x1c8] sm:$0xff]
        %v320 = vld [vmem:[#allocation3 + $0x1d0] sm:$0xff]
        %v321 = vld [vmem:[#allocation3 + $0x1d8] sm:$0xff]
        %v322 = vld [vmem:[#allocation3 + $0x1e0] sm:$0xff]
        %v323 = vld [vmem:[#allocation3 + $0x1e8] sm:$0xff]
        %v324 = vld [vmem:[#allocation3 + $0x1f0] sm:$0xff]
        %v325 = vld [vmem:[#allocation3 + $0x1f8] sm:$0xff]
        %s326 = sld [smem:[#allocation2]]
        %v327 = vstv %s326
        %v392 = vunpack.c.l.b16 %v262
        %v393 = vunpack.c.h.b16 %v262
        %v394 = vunpack.c.l.b16 %v263
        %v395 = vunpack.c.h.b16 %v263
        %v396 = vunpack.c.l.b16 %v264
        %v397 = vunpack.c.h.b16 %v264
        %v398 = vunpack.c.l.b16 %v265
        %v399 = vunpack.c.h.b16 %v265
        %v400 = vunpack.c.l.b16 %v266
        %v401 = vunpack.c.h.b16 %v266
        %v402 = vunpack.c.l.b16 %v267
        %v403 = vunpack.c.h.b16 %v267
        %v404 = vunpack.c.l.b16 %v268
        %v405 = vunpack.c.h.b16 %v268
        %v406 = vunpack.c.l.b16 %v269
        %v407 = vunpack.c.h.b16 %v269
        %v408 = vunpack.c.l.b16 %v270
        %v409 = vunpack.c.h.b16 %v270
        %v410 = vunpack.c.l.b16 %v271
        %v411 = vunpack.c.h.b16 %v271
        %v412 = vunpack.c.l.b16 %v272
        %v413 = vunpack.c.h.b16 %v272
        %v414 = vunpack.c.l.b16 %v273
        %v415 = vunpack.c.h.b16 %v273
        %v416 = vunpack.c.l.b16 %v274
        %v417 = vunpack.c.h.b16 %v274
        %v418 = vunpack.c.l.b16 %v275
        %v419 = vunpack.c.h.b16 %v275
        %v420 = vunpack.c.l.b16 %v276
        %v421 = vunpack.c.h.b16 %v276
        %v422 = vunpack.c.l.b16 %v277
        %v423 = vunpack.c.h.b16 %v277
        %v424 = vunpack.c.l.b16 %v278
        %v425 = vunpack.c.h.b16 %v278
        %v426 = vunpack.c.l.b16 %v279
        %v427 = vunpack.c.h.b16 %v279
        %v428 = vunpack.c.l.b16 %v280
        %v429 = vunpack.c.h.b16 %v280
        %v430 = vunpack.c.l.b16 %v281
        %v431 = vunpack.c.h.b16 %v281
        %v432 = vunpack.c.l.b16 %v282
        %v433 = vunpack.c.h.b16 %v282
        %v434 = vunpack.c.l.b16 %v283
        %v435 = vunpack.c.h.b16 %v283
        %v436 = vunpack.c.l.b16 %v284
        %v437 = vunpack.c.h.b16 %v284
        %v438 = vunpack.c.l.b16 %v285
        %v439 = vunpack.c.h.b16 %v285
        %v440 = vunpack.c.l.b16 %v286
        %v441 = vunpack.c.h.b16 %v286
        %v442 = vunpack.c.l.b16 %v287
        %v443 = vunpack.c.h.b16 %v287
        %v444 = vunpack.c.l.b16 %v288
        %v445 = vunpack.c.h.b16 %v288
        %v446 = vunpack.c.l.b16 %v289
        %v447 = vunpack.c.h.b16 %v289
        %v448 = vunpack.c.l.b16 %v290
        %v449 = vunpack.c.h.b16 %v290
        %v450 = vunpack.c.l.b16 %v291
        %v451 = vunpack.c.h.b16 %v291
        %v452 = vunpack.c.l.b16 %v292
        %v453 = vunpack.c.h.b16 %v292
        %v454 = vunpack.c.l.b16 %v293
        %v455 = vunpack.c.h.b16 %v293
        %v456 = vunpack.c.l.b16 %v294
        %v457 = vunpack.c.h.b16 %v294
        %v458 = vunpack.c.l.b16 %v295
        %v459 = vunpack.c.h.b16 %v295
        %v460 = vunpack.c.l.b16 %v296
        %v461 = vunpack.c.h.b16 %v296
        %v462 = vunpack.c.l.b16 %v297
        %v463 = vunpack.c.h.b16 %v297
        %v464 = vunpack.c.l.b16 %v298
        %v465 = vunpack.c.h.b16 %v298
        %v466 = vunpack.c.l.b16 %v299
        %v467 = vunpack.c.h.b16 %v299
        %v468 = vunpack.c.l.b16 %v300
        %v469 = vunpack.c.h.b16 %v300
        %v470 = vunpack.c.l.b16 %v301
        %v471 = vunpack.c.h.b16 %v301
        %v472 = vunpack.c.l.b16 %v302
        %v473 = vunpack.c.h.b16 %v302
        %v474 = vunpack.c.l.b16 %v303
        %v475 = vunpack.c.h.b16 %v303
        %v476 = vunpack.c.l.b16 %v304
        %v477 = vunpack.c.h.b16 %v304
        %v478 = vunpack.c.l.b16 %v305
        %v479 = vunpack.c.h.b16 %v305
        %v480 = vunpack.c.l.b16 %v306
        %v481 = vunpack.c.h.b16 %v306
        %v482 = vunpack.c.l.b16 %v307
        %v483 = vunpack.c.h.b16 %v307
        %v484 = vunpack.c.l.b16 %v308
        %v485 = vunpack.c.h.b16 %v308
        %v486 = vunpack.c.l.b16 %v309
        %v487 = vunpack.c.h.b16 %v309
        %v488 = vunpack.c.l.b16 %v310
        %v489 = vunpack.c.h.b16 %v310
        %v490 = vunpack.c.l.b16 %v311
        %v491 = vunpack.c.h.b16 %v311
        %v492 = vunpack.c.l.b16 %v312
        %v493 = vunpack.c.h.b16 %v312
        %v494 = vunpack.c.l.b16 %v313
        %v495 = vunpack.c.h.b16 %v313
        %v496 = vunpack.c.l.b16 %v314
        %v497 = vunpack.c.h.b16 %v314
        %v498 = vunpack.c.l.b16 %v315
        %v499 = vunpack.c.h.b16 %v315
        %v500 = vunpack.c.l.b16 %v316
        %v501 = vunpack.c.h.b16 %v316
        %v502 = vunpack.c.l.b16 %v317
        %v503 = vunpack.c.h.b16 %v317
        %v504 = vunpack.c.l.b16 %v318
        %v505 = vunpack.c.h.b16 %v318
        %v506 = vunpack.c.l.b16 %v319
        %v507 = vunpack.c.h.b16 %v319
        %v508 = vunpack.c.l.b16 %v320
        %v509 = vunpack.c.h.b16 %v320
        %v510 = vunpack.c.l.b16 %v321
        %v511 = vunpack.c.h.b16 %v321
        %v512 = vunpack.c.l.b16 %v322
        %v513 = vunpack.c.h.b16 %v322
        %v514 = vunpack.c.l.b16 %v323
        %v515 = vunpack.c.h.b16 %v323
        %v516 = vunpack.c.l.b16 %v324
        %v517 = vunpack.c.h.b16 %v324
        %v518 = vunpack.c.l.b16 %v325
        %v519 = vunpack.c.h.b16 %v325
        %v520 = vpack.c.b16 %v394, %v392
        %v521 = vpack.c.b16 %v395, %v393
        %v522 = vpack.c.b16 %v398, %v396
        %v523 = vpack.c.b16 %v399, %v397
        %v524 = vpack.c.b16 %v402, %v400
        %v525 = vpack.c.b16 %v403, %v401
        %v526 = vpack.c.b16 %v406, %v404
        %v527 = vpack.c.b16 %v407, %v405
        %v528 = vpack.c.b16 %v410, %v408
        %v529 = vpack.c.b16 %v411, %v409
        %v530 = vpack.c.b16 %v414, %v412
        %v531 = vpack.c.b16 %v415, %v413
        %v532 = vpack.c.b16 %v418, %v416
        %v533 = vpack.c.b16 %v419, %v417
        %v534 = vpack.c.b16 %v422, %v420
        %v535 = vpack.c.b16 %v423, %v421
        %v536 = vpack.c.b16 %v426, %v424
        %v537 = vpack.c.b16 %v427, %v425
        %v538 = vpack.c.b16 %v430, %v428
        %v539 = vpack.c.b16 %v431, %v429
        %v540 = vpack.c.b16 %v434, %v432
        %v541 = vpack.c.b16 %v435, %v433
        %v542 = vpack.c.b16 %v438, %v436
        %v543 = vpack.c.b16 %v439, %v437
        %v544 = vpack.c.b16 %v442, %v440
        %v545 = vpack.c.b16 %v443, %v441
        %v546 = vpack.c.b16 %v446, %v444
        %v547 = vpack.c.b16 %v447, %v445
        %v548 = vpack.c.b16 %v450, %v448
        %v549 = vpack.c.b16 %v451, %v449
        %v550 = vpack.c.b16 %v454, %v452
        %v551 = vpack.c.b16 %v455, %v453
        %v552 = vpack.c.b16 %v458, %v456
        %v553 = vpack.c.b16 %v459, %v457
        %v554 = vpack.c.b16 %v462, %v460
        %v555 = vpack.c.b16 %v463, %v461
        %v556 = vpack.c.b16 %v466, %v464
        %v557 = vpack.c.b16 %v467, %v465
        %v558 = vpack.c.b16 %v470, %v468
        %v559 = vpack.c.b16 %v471, %v469
        %v560 = vpack.c.b16 %v474, %v472
        %v561 = vpack.c.b16 %v475, %v473
        %v562 = vpack.c.b16 %v478, %v476
        %v563 = vpack.c.b16 %v479, %v477
        %v564 = vpack.c.b16 %v482, %v480
        %v565 = vpack.c.b16 %v483, %v481
        %v566 = vpack.c.b16 %v486, %v484
        %v567 = vpack.c.b16 %v487, %v485
        %v568 = vpack.c.b16 %v490, %v488
        %v569 = vpack.c.b16 %v491, %v489
        %v570 = vpack.c.b16 %v494, %v492
        %v571 = vpack.c.b16 %v495, %v493
        %v572 = vpack.c.b16 %v498, %v496
        %v573 = vpack.c.b16 %v499, %v497
        %v574 = vpack.c.b16 %v502, %v500
        %v575 = vpack.c.b16 %v503, %v501
        %v576 = vpack.c.b16 %v506, %v504
        %v577 = vpack.c.b16 %v507, %v505
        %v578 = vpack.c.b16 %v510, %v508
        %v579 = vpack.c.b16 %v511, %v509
        %v580 = vpack.c.b16 %v514, %v512
        %v581 = vpack.c.b16 %v515, %v513
        %v582 = vpack.c.b16 %v518, %v516
        %v583 = vpack.c.b16 %v519, %v517
        %648 = vmatprep.subr.bf16.mxu0 %v521
        %649 = vmatpush1.bf16.msra.mxu0 %v520
        %650 = vmatprep.subr.bf16.mxu0 %v523
        %651 = vmatpush1.bf16.msra.mxu0 %v522
        %652 = vmatprep.subr.bf16.mxu0 %v525
        %653 = vmatpush1.bf16.msra.mxu0 %v524
        %654 = vmatprep.subr.bf16.mxu0 %v527
        %655 = vmatpush1.bf16.msra.mxu0 %v526
        %656 = vmatprep.subr.bf16.mxu0 %v529
        %657 = vmatpush1.bf16.msra.mxu0 %v528
        %658 = vmatprep.subr.bf16.mxu0 %v531
        %659 = vmatpush1.bf16.msra.mxu0 %v530
        %660 = vmatprep.subr.bf16.mxu0 %v533
        %661 = vmatpush1.bf16.msra.mxu0 %v532
        %662 = vmatprep.subr.bf16.mxu0 %v535
        %663 = vmatpush1.bf16.msra.mxu0 %v534
        %664 = vmatprep.subr.bf16.mxu0 %v537
        %665 = vmatpush1.bf16.msra.mxu0 %v536
        %666 = vmatprep.subr.bf16.mxu0 %v539
        %667 = vmatpush1.bf16.msra.mxu0 %v538
        %668 = vmatprep.subr.bf16.mxu0 %v541
        %669 = vmatpush1.bf16.msra.mxu0 %v540
        %670 = vmatprep.subr.bf16.mxu0 %v543
        %671 = vmatpush1.bf16.msra.mxu0 %v542
        %672 = vmatprep.subr.bf16.mxu0 %v545
        %673 = vmatpush1.bf16.msra.mxu0 %v544
        %674 = vmatprep.subr.bf16.mxu0 %v547
        %675 = vmatpush1.bf16.msra.mxu0 %v546
        %676 = vmatprep.subr.bf16.mxu0 %v549
        %677 = vmatpush1.bf16.msra.mxu0 %v548
        %678 = vmatprep.subr.bf16.mxu0 %v551
        %679 = vmatpush1.bf16.msra.mxu0 %v550
        %680 = vmatprep.mubr.bf16.mxu0 %v259
        %681 = vmatmul.mubr.bf16.gmra.mrb[0].mxu0 %v258
        %v682 = vpop.f32.mrb[0].mxu0
        %v683 = vadd.f32 %v327, %v682
        %v684 = vpop.f32.mrb[0].mxu0
        %v685 = vadd.f32 %v327, %v684
        %v686 = vpop.f32.mrb[0].mxu0
        %v687 = vpop.f32.mrb[0].mxu0
        %688 = vdwg.mxu0
        %689 = vmatprep.subr.bf16.mxu0 %v553
        %690 = vmatpush1.bf16.msra.mxu0 %v552
        %691 = vmatprep.subr.bf16.mxu0 %v555
        %692 = vmatpush1.bf16.msra.mxu0 %v554
        %693 = vmatprep.subr.bf16.mxu0 %v557
        %694 = vmatpush1.bf16.msra.mxu0 %v556
        %695 = vmatprep.subr.bf16.mxu0 %v559
        %696 = vmatpush1.bf16.msra.mxu0 %v558
        %697 = vmatprep.subr.bf16.mxu0 %v561
        %698 = vmatpush1.bf16.msra.mxu0 %v560
        %699 = vmatprep.subr.bf16.mxu0 %v563
        %700 = vmatpush1.bf16.msra.mxu0 %v562
        %701 = vmatprep.subr.bf16.mxu0 %v565
        %702 = vmatpush1.bf16.msra.mxu0 %v564
        %703 = vmatprep.subr.bf16.mxu0 %v567
        %704 = vmatpush1.bf16.msra.mxu0 %v566
        %705 = vmatprep.subr.bf16.mxu0 %v569
        %706 = vmatpush1.bf16.msra.mxu0 %v568
        %707 = vmatprep.subr.bf16.mxu0 %v571
        %708 = vmatpush1.bf16.msra.mxu0 %v570
        %709 = vmatprep.subr.bf16.mxu0 %v573
        %710 = vmatpush1.bf16.msra.mxu0 %v572
        %711 = vmatprep.subr.bf16.mxu0 %v575
        %712 = vmatpush1.bf16.msra.mxu0 %v574
        %713 = vmatprep.subr.bf16.mxu0 %v577
        %714 = vmatpush1.bf16.msra.mxu0 %v576
        %715 = vmatprep.subr.bf16.mxu0 %v579
        %716 = vmatpush1.bf16.msra.mxu0 %v578
        %717 = vmatprep.subr.bf16.mxu0 %v581
        %718 = vmatpush1.bf16.msra.mxu0 %v580
        %719 = vmatprep.subr.bf16.mxu0 %v583
        %720 = vmatpush1.bf16.msra.mxu0 %v582
        %721 = vmatprep.mubr.bf16.mxu0 %v261
        %722 = vmatmul.mubr.bf16.gmra.mrb[0].mxu0 %v260
        %v723 = vpop.f32.mrb[0].mxu0
        %v724 = vadd.f32 %v683, %v723
        %v725 = vpop.f32.mrb[0].mxu0
        %v726 = vadd.f32 %v685, %v725
        %v727 = vpop.f32.mrb[0].mxu0
        %v728 = vpop.f32.mrb[0].mxu0
        %729 = vdwg.mxu0
        %v730 = vxor.u32 %v724, 2147483648
        %v731 = vxor.u32 %v726, 2147483648
        %v732 = vmul.f32 %v730, 1.442695
        %v733 = vpow.pop %v732
        %v734 = vmul.f32 %v731, 1.442695
        %v735 = vpow.pop %v734
        %v736 = vadd.f32 %v733, 1.0
        %v737 = vadd.f32 %v735, 1.0
        %v738 = vrcp.pop %v736
        %v739 = vmul.f32 1.0, %v738
        %v740 = vrcp.pop %v737
        %v741 = vmul.f32 1.0, %v740
        %v744 = vcombine.low %v739, %v741
        %v746 = vunpack.c.l.s4 1966171168
        %v747 = vunpack.c.0.s8 %v746
        %v748 = vlaneseq
        %v749 = vshrl.u32 %v748, 7
        %v750 = vsub.s32 %v747, %v749
        %v751 = vrot.slane %v744, %v750
        %v753 = vunpack.c.l.s4 1966171168
        %v754 = vunpack.c.0.s8 %v753
        %v755 = vlaneseq
        %v756 = vshrl.u32 %v755, 7
        %v757 = vsub.s32 %v754, %v756
        %v758 = vrot.slane %v751, %v757
        %v760 = vlaneseq
        %vm761 = vcmp.ge.s32.totalorder %v760, 0
        %vm762 = vcmp.lt.s32.totalorder %v760, 256
        %vm763 = vmand %vm761, %vm762
        %764 = vst.msk [vmem:[%s220] sm:$0x3] %vm763, %v758
        %s765 = sand.u32 %s114, 1
        %s766 = scalar_lea.sflag [#allocation5], %s765
        %s767 = sand.u32 %s114, 1
        %s768 = smul.addr %s767, 2
        %s769 = scalar_lea.vmem [#allocation8], %s768
        // Predicated region
        $region41: #{tpu_custom_call.1} parent=31 // pred_check
          %p770 = pneg %p124
        $region42: #{tpu_custom_call.1} parent=31 // pred_check_branch
          %772 = sbr.rel (%p770) target = $region44
        $region43: #{tpu_custom_call.1} parent=31 // pred_region
          %s774 = ssub.s32 32, 32
          %775 = vsyncadd %s766, %s774
          %s776 = smul.addr %s27, 2
          %s777 = smul.addr %s26, 6
          %s778 = sadd.s32 %s776, %s777
          %s779 = smul.addr %s778, 16
          %s780 = scalar_lea.hbm %s3, %s779
          %s782 = sshll.u32 %s769, 4
          %s783 = int_to_ptr.vmem [resolvable:$true] %s782
          %785 = dma.vmem_to_hbm [thread:$0]  %s783, 32, %s780, %s766
        $region44: #{tpu_custom_call.1} parent=31 // pred_fallthru
          _
      $region32: #{tpu_custom_call.1} parent=5 // pred_fallthru
        _
      %p786 = scmp.le.s32.totalorder 2, %s17
      // Predicated region
      $region45: #{tpu_custom_call.1} parent=5 // pred_check
        %p787 = pneg %p786
      $region46: #{tpu_custom_call.1} parent=5 // pred_check_branch
        %789 = sbr.rel (%p787) target = $region48
      $region47: #{tpu_custom_call.1} parent=5 // pred_region
        %s790 = ssub.s32 %s17, 2
        // Predicated region
        $region49: #{tpu_custom_call.1} parent=47 // pred_check
          %p791 = pneg %p130
        $region50: #{tpu_custom_call.1} parent=47 // pred_check_branch
          %793 = sbr.rel (%p791) target = $region52
        $region51: #{tpu_custom_call.1} parent=47 // pred_region
          %s794 = sand.u32 %s115, 1
          %s795 = scalar_lea.sflag [#allocation5], %s794
          %s796 = sand.u32 %s115, 1
          %s797 = smul.addr %s796, 2
          %s798 = scalar_lea.vmem [#allocation8], %s797
          %799 = dma.done %s795, 32
        $region52: #{tpu_custom_call.1} parent=47 // pred_fallthru
          _
      $region48: #{tpu_custom_call.1} parent=5 // pred_fallthru
        _
    $region6: #{tpu_custom_call.1} parent=1 // loop_footer
      %s21 = sadd.s32 1, %s17
    $region7: #{tpu_custom_call.1} parent=1 // loop_footer_branch
      %16 = sbr.rel target = $region3
    $region8: #{tpu_custom_call.1} parent=1 // loop_exit
      _
    %800 = vsyncpa [#allocation4], 1
    %s801 = scalar_lea.sflag [#allocation4], 1
    %802 = vsyncpa %s801, 1
    %803 = vsyncpa [#allocation7], 1
    %s804 = scalar_lea.sflag [#allocation7], 1
    %805 = vsyncpa %s804, 1
    %806 = vsyncpa [#allocation5], 1
    %s807 = scalar_lea.sflag [#allocation5], 1
    %808 = vsyncpa %s807, 1

</llo_original>
